<compile_context>
chip_gen: v5e
topology: v5e:2x2
jax: 0.10.0
libtpu: 0.0.40
codegen_flags: <defaults>
</compile_context>

<pallas_src>
import functools

import jax
import jax.numpy as jnp
from jax import lax
from jax.experimental import pallas as pl
from jax.experimental.pallas import tpu as pltpu

EPSILON = 0.001
MOMENTUM = 0.99

_LANE = 128
_MAX_TF = 2048  # measured: tiles >=512 lanes reach ~85% of HBM roofline; 2048 is plenty


def _vmem_capacity_bytes():
    """Chip VMEM capacity; conservative (v7x-sized 64 MiB) fallback if unknown."""
    try:
        info = pltpu.get_tpu_info()
        cap = getattr(info, "vmem_capacity_bytes", None)
        if cap:
            return int(cap)
    except Exception:
        pass
    return 64 * 1024 * 1024


def _pick_feature_tile(N, F_pad, x_itemsize, block_budget_bytes):
    """Largest lane-dense feature tile whose pipelined blocks fit the budget.

    Per 128 feature lanes of one grid step we account for:
      2x (N,128) x-in blocks (double buffered) + 2x (N,128) y-out blocks
      + one (N,128) f32 compute-temporary headroom + tiny (1,128) f32 rows.
    """
    units_total = max(1, F_pad // _LANE)
    bytes_per_unit = _LANE * (4 * N * x_itemsize + 2 * N * 4 + 8 * 4)
    units = max(1, min(units_total,
                       block_budget_bytes // bytes_per_unit,
                       _MAX_TF // _LANE))
    # Keep >=2 grid steps so both v7x TensorCores get work on 'parallel' axes.
    if units_total >= 2:
        units = max(1, min(units, units_total // 2))
    # Make the tile evenly divide the padded feature extent (fully lane-dense
    # blocks, no ragged trailing block).
    while units > 1 and units_total % units != 0:
        units -= 1
    return units * _LANE


def _bn_train_kernel(x_ref, gamma_ref, beta_ref, y_ref, mu_ref, var_ref, *, epsilon):
    # x_ref: (N, tf)   gamma/beta: (1, tf)   y: (N, tf)   mu/var: (1, tf)
    # All math stays in f32 (v5e VPU/EUP have no bf16); cast only on the store.
    x = x_ref[...].astype(jnp.float32)
    n = x.shape[0]

    # batch_mu = x.sum(dim=0) / N
    mu = jnp.sum(x, axis=0, keepdims=True) * (1.0 / n)
    diff = x - mu

    # torch.var(dim=0) is the *unbiased* variance (divide by N-1); the module
    # then divides it again by N.  N == 1 is degenerate (torch yields NaN too).
    inv_nm1 = (1.0 / (n - 1)) if n > 1 else float("nan")
    var_unbiased = jnp.sum(diff * diff, axis=0, keepdims=True) * inv_nm1
    batch_var = var_unbiased * (1.0 / n)

    inv_std = lax.rsqrt(batch_var + epsilon)

    # Fold the affine into one FMA-shaped expression on the (1, tf) row:
    #   gamma*(x-mu)*inv_std + beta  ==  x*scale + bias
    gamma = gamma_ref[...].astype(jnp.float32)
    beta = beta_ref[...].astype(jnp.float32)
    scale = gamma * inv_std
    bias = beta - scale * mu

    y_ref[...] = (x * scale + bias).astype(y_ref.dtype)
    mu_ref[...] = mu
    var_ref[...] = batch_var


def my_batchnorm2d_forward_train(
    x, gamma, beta, mu_state, var_state, *,
    it_call=1, batch_size=None, epsilon=EPSILON, momentum=MOMENTUM,
):
    """Training-mode forward of myBatchNorm2d.

    Returns (x_bn, new_mu_state, new_var_state).
    """
    N, F = x.shape
    if batch_size is None:
        batch_size = N  # first call: self.batch_size = x.shape[0]

    # ---- feature-axis padding to a multiple of 128 (lane-dense blocks) ----
    F_pad = ((F + _LANE - 1) // _LANE) * _LANE
    if F_pad != F:
        pad = F_pad - F
        # Pad gamma with 1s / beta with 0s so padded columns stay finite (they
        # are sliced away below and never contaminate real columns).
        x_p = jnp.pad(x, ((0, 0), (0, pad)))
        gamma_p = jnp.pad(gamma, ((0, 0), (0, pad)), constant_values=1.0)
        beta_p = jnp.pad(beta, ((0, 0), (0, pad)))
    else:
        x_p, gamma_p, beta_p = x, gamma, beta

    # ---- VMEM-aware tile selection (re-derived per chip: 64 MiB on v7x) ----
    vmem_cap = _vmem_capacity_bytes()
    block_budget = vmem_cap // 2            # budget for pipelined blocks
    vmem_limit = int(vmem_cap * 0.75)       # raise the scoped-VMEM limit
    x_itemsize = jnp.dtype(x.dtype).itemsize
    tf = _pick_feature_tile(N, F_pad, x_itemsize, block_budget)
    grid = (F_pad // tf,)
    # TODO(synk): for very large N where even (N, 128) blocks exceed VMEM, add a
    # batch-axis grid dimension with a sum/sum-of-squares accumulator pass.

    kernel = functools.partial(_bn_train_kernel, epsilon=epsilon)

    y, batch_mu, batch_var = pl.pallas_call(
        kernel,
        out_shape=(
            jax.ShapeDtypeStruct((N, F_pad), x.dtype),
            jax.ShapeDtypeStruct((1, F_pad), jnp.float32),
            jax.ShapeDtypeStruct((1, F_pad), jnp.float32),
        ),
        grid_spec=pltpu.PrefetchScalarGridSpec(
            num_scalar_prefetch=0,
            grid=grid,
            in_specs=[
                pl.BlockSpec((N, tf), lambda j: (0, j)),
                pl.BlockSpec((1, tf), lambda j: (0, j)),
                pl.BlockSpec((1, tf), lambda j: (0, j)),
            ],
            out_specs=[
                pl.BlockSpec((N, tf), lambda j: (0, j)),
                pl.BlockSpec((1, tf), lambda j: (0, j)),
                pl.BlockSpec((1, tf), lambda j: (0, j)),
            ],
        ),
        compiler_params=pltpu.CompilerParams(
            dimension_semantics=("parallel",),
            vmem_limit_bytes=vmem_limit,
        ),
    )(x_p, gamma_p, beta_p)

    if F_pad != F:
        y = y[:, :F]
        batch_mu = batch_mu[:, :F]
        batch_var = batch_var[:, :F]

    # ---- running-statistics state update (plain-JAX glue, matches module) ----
    if N == batch_size:
        running_mu, running_var = batch_mu, batch_var
    else:
        running_mu = batch_mu * batch_size / N
        running_var = batch_var * batch_size / N
    alpha = momentum / it_call
    new_mu = running_mu * alpha + mu_state * (1.0 - alpha)
    new_var = running_var * alpha + var_state * (1.0 - alpha)

    return y, new_mu, new_var


def _reference_forward_train(x, gamma, beta, epsilon=EPSILON):
    n = x.shape[0]
    mu = jnp.sum(x, axis=0, keepdims=True) / n
    var = jnp.sum((x - mu) ** 2, axis=0, keepdims=True) / (n - 1) / n
    return gamma * (x - mu) / jnp.sqrt(var + epsilon) + beta


if __name__ == "__main__":
    key = jax.random.PRNGKey(0)

    # ---- test 1: module's deterministic init, F a multiple of 128 ----
    N, F = 8, 256  # (batch, input_size)
    x = jax.random.normal(key, (N, F), dtype=jnp.float32)
    gamma = jnp.ones((1, F), dtype=jnp.float32)      # self.gamma
    beta = jnp.zeros((1, F), dtype=jnp.float32)      # self.beta
    mu_state = jnp.zeros((1, F), dtype=jnp.float32)  # self.mu
    var_state = jnp.ones((1, F), dtype=jnp.float32)  # self.var

    y, new_mu, new_var = my_batchnorm2d_forward_train(
        x, gamma, beta, mu_state, var_state, it_call=1, batch_size=None,
    )
    jax.block_until_ready((y, new_mu, new_var))
    y_ref = _reference_forward_train(x, gamma, beta)
    assert jnp.allclose(y, y_ref, atol=1e-4, rtol=1e-4), "mismatch vs reference (F=256)"

    # ---- test 2: non-multiple-of-128 features + non-trivial affine (pad path) ----
    k1, k2, k3 = jax.random.split(key, 3)
    N2, F2 = 4, 200
    x2 = jax.random.normal(k1, (N2, F2), dtype=jnp.float32)
    gamma2 = 1.0 + 0.1 * jax.random.normal(k2, (1, F2), dtype=jnp.float32)
    beta2 = 0.1 * jax.random.normal(k3, (1, F2), dtype=jnp.float32)
    mu2 = jnp.zeros((1, F2), dtype=jnp.float32)
    var2 = jnp.ones((1, F2), dtype=jnp.float32)

    y2, nm2, nv2 = my_batchnorm2d_forward_train(
        x2, gamma2, beta2, mu2, var2, it_call=2, batch_size=N2,
    )
    jax.block_until_ready((y2, nm2, nv2))
    y2_ref = _reference_forward_train(x2, gamma2, beta2)
    assert jnp.allclose(y2, y2_ref, atol=1e-4, rtol=1e-4), "mismatch vs reference (F=200)"

    print("KERNEL_OK")
</pallas_src>

<mosaic_0001>
module attributes {stable_mosaic.version = 11 : i64} {
  func.func @_bn_train_kernel(%arg0: i32, %arg1: memref<8x128xf32, #tpu.memory_space<vmem>>, %arg2: memref<1x128xf32, #tpu.memory_space<vmem>>, %arg3: memref<1x128xf32, #tpu.memory_space<vmem>>, %arg4: memref<8x128xf32, #tpu.memory_space<vmem>>, %arg5: memref<1x128xf32, #tpu.memory_space<vmem>>, %arg6: memref<1x128xf32, #tpu.memory_space<vmem>>) attributes {dimension_semantics = [#tpu.dimension_semantics<parallel>], iteration_bounds = array<i64: 2>, scalar_prefetch = 0 : i64, scratch_operands = 0 : i64, tpu.core_type = #tpu.core_type<tc>, window_params = [{transform_indices = @transform_0, window_bounds = array<i64: 8, 128>}, {transform_indices = @transform_1, window_bounds = array<i64: 1, 128>}, {transform_indices = @transform_2, window_bounds = array<i64: 1, 128>}, {transform_indices = @transform_3, window_bounds = array<i64: 8, 128>}, {transform_indices = @transform_4, window_bounds = array<i64: 1, 128>}, {transform_indices = @transform_5, window_bounds = array<i64: 1, 128>}]} {
    %c0 = arith.constant 0 : index
    %c0_0 = arith.constant 0 : index
    %0 = vector.load %arg1[%c0, %c0_0] : memref<8x128xf32, #tpu.memory_space<vmem>>, vector<8x128xf32>
    %cst = arith.constant dense<0.000000e+00> : vector<128xf32>
    %1 = vector.multi_reduction <add>, %0, %cst [0] : vector<8x128xf32> to vector<128xf32>
    %2 = vector.shape_cast %1 : vector<128xf32> to vector<1x128xf32>
    %cst_1 = arith.constant 1.250000e-01 : f32
    %3 = vector.broadcast %cst_1 : f32 to vector<1x128xf32>
    %4 = arith.mulf %2, %3 : vector<1x128xf32>
    %5 = vector.broadcast %4 : vector<1x128xf32> to vector<8x128xf32>
    %6 = arith.subf %0, %5 : vector<8x128xf32>
    %7 = arith.mulf %6, %6 : vector<8x128xf32>
    %cst_2 = arith.constant dense<0.000000e+00> : vector<128xf32>
    %8 = vector.multi_reduction <add>, %7, %cst_2 [0] : vector<8x128xf32> to vector<128xf32>
    %9 = vector.shape_cast %8 : vector<128xf32> to vector<1x128xf32>
    %cst_3 = arith.constant 0.142857149 : f32
    %10 = vector.broadcast %cst_3 : f32 to vector<1x128xf32>
    %11 = arith.mulf %9, %10 : vector<1x128xf32>
    %cst_4 = arith.constant 1.250000e-01 : f32
    %12 = vector.broadcast %cst_4 : f32 to vector<1x128xf32>
    %13 = arith.mulf %11, %12 : vector<1x128xf32>
    %cst_5 = arith.constant 1.000000e-03 : f32
    %14 = vector.broadcast %cst_5 : f32 to vector<1x128xf32>
    %15 = arith.addf %13, %14 : vector<1x128xf32>
    %16 = math.rsqrt %15 : vector<1x128xf32>
    %c0_6 = arith.constant 0 : index
    %c0_7 = arith.constant 0 : index
    %17 = vector.load %arg2[%c0_6, %c0_7] : memref<1x128xf32, #tpu.memory_space<vmem>>, vector<1x128xf32>
    %c0_8 = arith.constant 0 : index
    %c0_9 = arith.constant 0 : index
    %18 = vector.load %arg3[%c0_8, %c0_9] : memref<1x128xf32, #tpu.memory_space<vmem>>, vector<1x128xf32>
    %19 = arith.mulf %17, %16 : vector<1x128xf32>
    %20 = arith.mulf %19, %4 : vector<1x128xf32>
    %21 = arith.subf %18, %20 : vector<1x128xf32>
    %22 = vector.broadcast %19 : vector<1x128xf32> to vector<8x128xf32>
    %23 = arith.mulf %0, %22 : vector<8x128xf32>
    %24 = vector.broadcast %21 : vector<1x128xf32> to vector<8x128xf32>
    %25 = arith.addf %23, %24 : vector<8x128xf32>
    %c0_10 = arith.constant 0 : index
    %c0_11 = arith.constant 0 : index
    %26 = vector.load %arg4[%c0_10, %c0_11] : memref<8x128xf32, #tpu.memory_space<vmem>>, vector<8x128xf32>
    tpu.vector_store %arg4[%c0_10, %c0_11], %25 {strides = array<i32>} : memref<8x128xf32, #tpu.memory_space<vmem>>, vector<8x128xf32>,
    %c0_12 = arith.constant 0 : index
    %c0_13 = arith.constant 0 : index
    %27 = vector.load %arg5[%c0_12, %c0_13] : memref<1x128xf32, #tpu.memory_space<vmem>>, vector<1x128xf32>
    tpu.vector_store %arg5[%c0_12, %c0_13], %4 {strides = array<i32>} : memref<1x128xf32, #tpu.memory_space<vmem>>, vector<1x128xf32>,
    %c0_14 = arith.constant 0 : index
    %c0_15 = arith.constant 0 : index
    %28 = vector.load %arg6[%c0_14, %c0_15] : memref<1x128xf32, #tpu.memory_space<vmem>>, vector<1x128xf32>
    tpu.vector_store %arg6[%c0_14, %c0_15], %13 {strides = array<i32>} : memref<1x128xf32, #tpu.memory_space<vmem>>, vector<1x128xf32>,
    return
  }
  func.func @transform_0(%arg0: i32) -> (i32, i32) {
    %c0_i32 = arith.constant 0 : i32
    %c0_i32_0 = arith.constant 0 : i32
    return %c0_i32, %arg0 : i32, i32
  }
  func.func @transform_1(%arg0: i32) -> (i32, i32) {
    %c0_i32 = arith.constant 0 : i32
    %c0_i32_0 = arith.constant 0 : i32
    return %c0_i32, %arg0 : i32, i32
  }
  func.func @transform_2(%arg0: i32) -> (i32, i32) {
    %c0_i32 = arith.constant 0 : i32
    %c0_i32_0 = arith.constant 0 : i32
    return %c0_i32, %arg0 : i32, i32
  }
  func.func @transform_3(%arg0: i32) -> (i32, i32) {
    %c0_i32 = arith.constant 0 : i32
    %c0_i32_0 = arith.constant 0 : i32
    return %c0_i32, %arg0 : i32, i32
  }
  func.func @transform_4(%arg0: i32) -> (i32, i32) {
    %c0_i32 = arith.constant 0 : i32
    %c0_i32_0 = arith.constant 0 : i32
    return %c0_i32, %arg0 : i32, i32
  }
  func.func @transform_5(%arg0: i32) -> (i32, i32) {
    %c0_i32 = arith.constant 0 : i32
    %c0_i32_0 = arith.constant 0 : i32
    return %c0_i32, %arg0 : i32, i32
  }
}

</mosaic_0001>

<llo_original>
// kernel: tpu_custom_call.1
$region0: #{tpu_custom_call.1}
  #allocation0 [shape = 'u32[]', space=smem, size = 0x4, offset = 0x4, fixed_abs, tag = 'smem constant byte address 0x4 - core index']
  #allocation1 [shape = 'u32[72,128]{1,0:T(1,128)}', space=vmem, size = 0x9000, scoped, tag = 'internal scratch']
  %s0 = inlined_call_operand.hbm [shape: f32[8,256], index: 0, kind: input, shape index: {}]
  %s1 = inlined_call_operand.hbm [shape: f32[1,256], index: 1, kind: input, shape index: {}]
  %s2 = inlined_call_operand.hbm [shape: f32[1,256], index: 2, kind: input, shape index: {}]
  %s3 = inlined_call_operand.hbm [shape: f32[8,256], index: 3, kind: output, shape index: {0}]
  %s4 = inlined_call_operand.hbm [shape: f32[1,256], index: 4, kind: output, shape index: {1}]
  %s5 = inlined_call_operand.hbm [shape: f32[1,256], index: 5, kind: output, shape index: {2}]
  %6 = xla_tuple %s3, %s4, %s5
  %s7 = sld [smem:[#allocation0]]
  $region73: #{tpu_custom_call.1} parent=0
    _
  %s9 = ssub.s32 1, %s7
  %s10 = scalar_select 0, %s9, %s7
  $region1: #{tpu_custom_call.1} parent=0
    #allocation2 [shape = 'u8[8192]{0}', space=vmem, size = 0x2000, scoped, tag = 'input window, operand 0']
    #allocation3 [shape = 's32[2]{0}', space=sflag, size = 0x8, scoped, tag = 'scoped memory for tpu_custom_call.1']
    #allocation4 [shape = 's32[2]{0}', space=sflag, size = 0x8, scoped, tag = 'scoped memory for tpu_custom_call.1']
    #allocation5 [shape = 'u8[1024]{0}', space=vmem, size = 0x400, scoped, tag = 'input window, operand 1']
    #allocation6 [shape = 's32[2]{0}', space=sflag, size = 0x8, scoped, tag = 'scoped memory for tpu_custom_call.1']
    #allocation7 [shape = 'u8[1024]{0}', space=vmem, size = 0x400, scoped, tag = 'input window, operand 2']
    #allocation8 [shape = 'u8[8192]{0}', space=vmem, size = 0x2000, scoped, tag = 'output window, operand 0']
    #allocation9 [shape = 'u8[1024]{0}', space=vmem, size = 0x400, scoped, tag = 'output window, operand 1']
    #allocation10 [shape = 's32[2]{0}', space=sflag, size = 0x8, scoped, tag = 'scoped memory for tpu_custom_call.1']
    #allocation11 [shape = 'u8[1024]{0}', space=vmem, size = 0x400, scoped, tag = 'output window, operand 2']
    %11 = vsyncpa [#allocation3], 0
    %s12 = scalar_lea.sflag [#allocation3], 1
    %13 = vsyncpa %s12, 0
    %14 = vsyncpa [#allocation6], 0
    %s15 = scalar_lea.sflag [#allocation6], 1
    %16 = vsyncpa %s15, 0
    %17 = vsyncpa [#allocation4], 0
    %s18 = scalar_lea.sflag [#allocation4], 1
    %19 = vsyncpa %s18, 0
    %20 = vsyncpa [#allocation10], 0
    %s21 = scalar_lea.sflag [#allocation10], 1
    %22 = vsyncpa %s21, 0
    loop: start=0, step=1, limit=4
    $region2: #{tpu_custom_call.1} parent=1 // loop_pre_header
      _
    $region3: #{tpu_custom_call.1} parent=1 // loop_header
      %s24 = sphi 0, %s28
      %p25 = scmp.ge.s32.totalorder %s24, 4
      %s34 = sphi 0, %s36
      %s37 = sphi 0, %s34
      %s38 = sphi 0, %s37
      %s54 = sphi 0, %s38
      %s60 = sphi 0, %s62
      %s63 = sphi 0, %s60
      %s64 = sphi 0, %s63
      %s80 = sphi 0, %s64
      %s86 = sphi 0, %s88
      %s89 = sphi 0, %s86
      %s90 = sphi 0, %s89
      %s106 = sphi 0, %s90
      %s112 = sphi 0, %s114
      %s115 = sphi 0, %s112
      %s116 = sphi 0, %s115
      %s132 = sphi 0, %s116
      %s138 = sphi 0, %s140
      %s141 = sphi 0, %s138
      %s142 = sphi 0, %s141
      %s158 = sphi 0, %s142
      %s164 = sphi 0, %s166
      %s167 = sphi 0, %s164
      %s168 = sphi 0, %s167
      %s184 = sphi 0, %s168
    $region4: #{tpu_custom_call.1} parent=1 // loop_header_branch
      %27 = sbr.rel (%p25) target = $region8
    $region5: #{tpu_custom_call.1} parent=1 // loop_body
      %s29 = ssub.s32 %s24, 1
      %s30 = ssub.s32 %s24, 2
      %s31 = sadd.s32 %s24, 1
      %s32 = ssub.s32 %s24, %s31
      %p33 = scmp.eq.s32.totalorder %s32, 0
      %s35 = sadd.s32 %s34, 1
      %s36 = scalar_select %p33, %s34, %s35
      %p39 = pneg %p33
      %p40 = scmp.eq.s32.totalorder %s24, 1
      %p41 = por %p39, %p40
      %p42 = scmp.ne.s32.totalorder %s34, %s37
      %p43 = scmp.eq.s32.totalorder %s24, 0
      %p44 = por %p42, %p43
      %p45 = scmp.ne.s32.totalorder %s34, %s37
      %p46 = scmp.eq.s32.totalorder %s29, 1
      %p47 = por %p45, %p46
      %p48 = scmp.ne.s32.totalorder %s37, %s38
      %p49 = scmp.eq.s32.totalorder %s29, 0
      %p50 = por %p48, %p49
      %p51 = scmp.ne.s32.totalorder %s37, %s38
      %p52 = scmp.eq.s32.totalorder %s30, 1
      %p53 = por %p51, %p52
      %p55 = scmp.ne.s32.totalorder %s38, %s54
      %p56 = scmp.eq.s32.totalorder %s30, 0
      %p57 = por %p55, %p56
      %s58 = ssub.s32 %s24, %s31
      %p59 = scmp.eq.s32.totalorder %s58, 0
      %s61 = sadd.s32 %s60, 1
      %s62 = scalar_select %p59, %s60, %s61
      %p65 = pneg %p59
      %p66 = scmp.eq.s32.totalorder %s24, 1
      %p67 = por %p65, %p66
      %p68 = scmp.ne.s32.totalorder %s60, %s63
      %p69 = scmp.eq.s32.totalorder %s24, 0
      %p70 = por %p68, %p69
      %p71 = scmp.ne.s32.totalorder %s60, %s63
      %p72 = scmp.eq.s32.totalorder %s29, 1
      %p73 = por %p71, %p72
      %p74 = scmp.ne.s32.totalorder %s63, %s64
      %p75 = scmp.eq.s32.totalorder %s29, 0
      %p76 = por %p74, %p75
      %p77 = scmp.ne.s32.totalorder %s63, %s64
      %p78 = scmp.eq.s32.totalorder %s30, 1
      %p79 = por %p77, %p78
      %p81 = scmp.ne.s32.totalorder %s64, %s80
      %p82 = scmp.eq.s32.totalorder %s30, 0
      %p83 = por %p81, %p82
      %s84 = ssub.s32 %s24, %s31
      %p85 = scmp.eq.s32.totalorder %s84, 0
      %s87 = sadd.s32 %s86, 1
      %s88 = scalar_select %p85, %s86, %s87
      %p91 = pneg %p85
      %p92 = scmp.eq.s32.totalorder %s24, 1
      %p93 = por %p91, %p92
      %p94 = scmp.ne.s32.totalorder %s86, %s89
      %p95 = scmp.eq.s32.totalorder %s24, 0
      %p96 = por %p94, %p95
      %p97 = scmp.ne.s32.totalorder %s86, %s89
      %p98 = scmp.eq.s32.totalorder %s29, 1
      %p99 = por %p97, %p98
      %p100 = scmp.ne.s32.totalorder %s89, %s90
      %p101 = scmp.eq.s32.totalorder %s29, 0
      %p102 = por %p100, %p101
      %p103 = scmp.ne.s32.totalorder %s89, %s90
      %p104 = scmp.eq.s32.totalorder %s30, 1
      %p105 = por %p103, %p104
      %p107 = scmp.ne.s32.totalorder %s90, %s106
      %p108 = scmp.eq.s32.totalorder %s30, 0
      %p109 = por %p107, %p108
      %s110 = ssub.s32 %s24, %s31
      %p111 = scmp.eq.s32.totalorder %s110, 0
      %s113 = sadd.s32 %s112, 1
      %s114 = scalar_select %p111, %s112, %s113
      %p117 = pneg %p111
      %p118 = scmp.eq.s32.totalorder %s24, 1
      %p119 = por %p117, %p118
      %p120 = scmp.ne.s32.totalorder %s112, %s115
      %p121 = scmp.eq.s32.totalorder %s24, 0
      %p122 = por %p120, %p121
      %p123 = scmp.ne.s32.totalorder %s112, %s115
      %p124 = scmp.eq.s32.totalorder %s29, 1
      %p125 = por %p123, %p124
      %p126 = scmp.ne.s32.totalorder %s115, %s116
      %p127 = scmp.eq.s32.totalorder %s29, 0
      %p128 = por %p126, %p127
      %p129 = scmp.ne.s32.totalorder %s115, %s116
      %p130 = scmp.eq.s32.totalorder %s30, 1
      %p131 = por %p129, %p130
      %p133 = scmp.ne.s32.totalorder %s116, %s132
      %p134 = scmp.eq.s32.totalorder %s30, 0
      %p135 = por %p133, %p134
      %s136 = ssub.s32 %s24, %s31
      %p137 = scmp.eq.s32.totalorder %s136, 0
      %s139 = sadd.s32 %s138, 1
      %s140 = scalar_select %p137, %s138, %s139
      %p143 = pneg %p137
      %p144 = scmp.eq.s32.totalorder %s24, 1
      %p145 = por %p143, %p144
      %p146 = scmp.ne.s32.totalorder %s138, %s141
      %p147 = scmp.eq.s32.totalorder %s24, 0
      %p148 = por %p146, %p147
      %p149 = scmp.ne.s32.totalorder %s138, %s141
      %p150 = scmp.eq.s32.totalorder %s29, 1
      %p151 = por %p149, %p150
      %p152 = scmp.ne.s32.totalorder %s141, %s142
      %p153 = scmp.eq.s32.totalorder %s29, 0
      %p154 = por %p152, %p153
      %p155 = scmp.ne.s32.totalorder %s141, %s142
      %p156 = scmp.eq.s32.totalorder %s30, 1
      %p157 = por %p155, %p156
      %p159 = scmp.ne.s32.totalorder %s142, %s158
      %p160 = scmp.eq.s32.totalorder %s30, 0
      %p161 = por %p159, %p160
      %s162 = ssub.s32 %s24, %s31
      %p163 = scmp.eq.s32.totalorder %s162, 0
      %s165 = sadd.s32 %s164, 1
      %s166 = scalar_select %p163, %s164, %s165
      %p169 = pneg %p163
      %p170 = scmp.eq.s32.totalorder %s24, 1
      %p171 = por %p169, %p170
      %p172 = scmp.ne.s32.totalorder %s164, %s167
      %p173 = scmp.eq.s32.totalorder %s24, 0
      %p174 = por %p172, %p173
      %p175 = scmp.ne.s32.totalorder %s164, %s167
      %p176 = scmp.eq.s32.totalorder %s29, 1
      %p177 = por %p175, %p176
      %p178 = scmp.ne.s32.totalorder %s167, %s168
      %p179 = scmp.eq.s32.totalorder %s29, 0
      %p180 = por %p178, %p179
      %p181 = scmp.ne.s32.totalorder %s167, %s168
      %p182 = scmp.eq.s32.totalorder %s30, 1
      %p183 = por %p181, %p182
      %p185 = scmp.ne.s32.totalorder %s168, %s184
      %p186 = scmp.eq.s32.totalorder %s30, 0
      %p187 = por %p185, %p186
      %p188 = scmp.le.s32.totalorder 1, %s24
      %p189 = scmp.lt.s32.totalorder %s24, 3
      %p190 = pnand %p188, %p189
      %p191 = pneg %p190
      // Predicated region
      $region9: #{tpu_custom_call.1} parent=5 // pred_check
        _
      $region10: #{tpu_custom_call.1} parent=5 // pred_check_branch
        %193 = sbr.rel (%p190) target = $region12
      $region11: #{tpu_custom_call.1} parent=5 // pred_region
        %s194 = ssub.s32 %s24, 1
      $region12: #{tpu_custom_call.1} parent=5 // pred_fallthru
        _
      %p195 = scmp.lt.s32.totalorder %s24, 2
      // Predicated region
      $region13: #{tpu_custom_call.1} parent=5 // pred_check
        %p196 = pneg %p195
      $region14: #{tpu_custom_call.1} parent=5 // pred_check_branch
        %198 = sbr.rel (%p196) target = $region16
      $region15: #{tpu_custom_call.1} parent=5 // pred_region
        // Predicated region
        $region17: #{tpu_custom_call.1} parent=15 // pred_check
          %p199 = pneg %p44
        $region18: #{tpu_custom_call.1} parent=15 // pred_check_branch
          %201 = sbr.rel (%p199) target = $region20
        $region19: #{tpu_custom_call.1} parent=15 // pred_region
          %s202 = sand.u32 %s34, 1
          %s203 = scalar_lea.sflag [#allocation3], %s202
          %s204 = sand.u32 %s34, 1
          %s205 = smul.addr %s204, 8
          %s206 = scalar_lea.vmem [#allocation2], %s205
          %208 = vsyncadd %s203, 0
          %s209 = smul.addr %s24, 8
          %s210 = scalar_lea.hbm %s0, %s209
          %s212 = sshll.u32 %s210, 4
          %s213 = int_to_ptr.hbm [resolvable:$true] %s212
          %s214 = sshll.u32 %s206, 4
          %s215 = int_to_ptr.vmem [resolvable:$true] %s214
          %217 = dma.hbm_to_vmem [thread:$0]  %s213, 128, %s215, %s203
        $region20: #{tpu_custom_call.1} parent=15 // pred_fallthru
          _
        // Predicated region
        $region21: #{tpu_custom_call.1} parent=15 // pred_check
          %p218 = pneg %p70
        $region22: #{tpu_custom_call.1} parent=15 // pred_check_branch
          %220 = sbr.rel (%p218) target = $region24
        $region23: #{tpu_custom_call.1} parent=15 // pred_region
          %s221 = sand.u32 %s24, 1
          %s222 = scalar_lea.sflag [#allocation6], %s221
          %s223 = sand.u32 %s60, 1
          %s224 = scalar_lea.vmem [#allocation5], %s223
          %226 = vsyncadd %s222, 0
          %s227 = scalar_lea.hbm %s1, %s24
          %s229 = sshll.u32 %s227, 4
          %s230 = int_to_ptr.hbm [resolvable:$true] %s229
          %s231 = sshll.u32 %s224, 4
          %s232 = int_to_ptr.vmem [resolvable:$true] %s231
          %234 = dma.hbm_to_vmem [thread:$0]  %s230, 16, %s232, %s222
        $region24: #{tpu_custom_call.1} parent=15 // pred_fallthru
          _
        // Predicated region
        $region25: #{tpu_custom_call.1} parent=15 // pred_check
          %p235 = pneg %p96
        $region26: #{tpu_custom_call.1} parent=15 // pred_check_branch
          %237 = sbr.rel (%p235) target = $region28
        $region27: #{tpu_custom_call.1} parent=15 // pred_region
          %s238 = sand.u32 %s24, 1
          %s239 = scalar_lea.sflag [#allocation6], %s238
          %s240 = sand.u32 %s86, 1
          %s241 = scalar_lea.vmem [#allocation7], %s240
          %243 = vsyncadd %s239, 0
          %s244 = scalar_lea.hbm %s2, %s24
          %s246 = sshll.u32 %s244, 4
          %s247 = int_to_ptr.hbm [resolvable:$true] %s246
          %s248 = sshll.u32 %s241, 4
          %s249 = int_to_ptr.vmem [resolvable:$true] %s248
          %251 = dma.hbm_to_vmem [thread:$0]  %s247, 16, %s249, %s239
        $region28: #{tpu_custom_call.1} parent=15 // pred_fallthru
          _
      $region16: #{tpu_custom_call.1} parent=5 // pred_fallthru
        _
      %p252 = scmp.le.s32.totalorder 1, %s24
      %p253 = scmp.lt.s32.totalorder %s24, 3
      %p254 = pnand %p252, %p253
      %p255 = pneg %p254
      // Predicated region
      $region29: #{tpu_custom_call.1} parent=5 // pred_check
        _
      $region30: #{tpu_custom_call.1} parent=5 // pred_check_branch
        %257 = sbr.rel (%p254) target = $region32
      $region31: #{tpu_custom_call.1} parent=5 // pred_region
        %s258 = ssub.s32 %s24, 1
        %s259 = sand.u32 %s37, 1
        %s260 = scalar_lea.sflag [#allocation3], %s259
        %s261 = sand.u32 %s37, 1
        %s262 = smul.addr %s261, 8
        %s263 = scalar_lea.vmem [#allocation2], %s262
        // Predicated region
        $region33: #{tpu_custom_call.1} parent=31 // pred_check
          %p264 = pneg %p50
        $region34: #{tpu_custom_call.1} parent=31 // pred_check_branch
          %266 = sbr.rel (%p264) target = $region36
        $region35: #{tpu_custom_call.1} parent=31 // pred_region
          %268 = dma.done %s260, 128
        $region36: #{tpu_custom_call.1} parent=31 // pred_fallthru
          _
        %s269 = sand.u32 %s29, 1
        %s270 = scalar_lea.sflag [#allocation6], %s269
        %s271 = sand.u32 %s63, 1
        %s272 = scalar_lea.vmem [#allocation5], %s271
        // Predicated region
        $region37: #{tpu_custom_call.1} parent=31 // pred_check
          %p273 = pneg %p76
        $region38: #{tpu_custom_call.1} parent=31 // pred_check_branch
          %275 = sbr.rel (%p273) target = $region40
        $region39: #{tpu_custom_call.1} parent=31 // pred_region
          %277 = dma.done %s270, 16
        $region40: #{tpu_custom_call.1} parent=31 // pred_fallthru
          _
        %s278 = sand.u32 %s29, 1
        %s279 = scalar_lea.sflag [#allocation6], %s278
        %s280 = sand.u32 %s89, 1
        %s281 = scalar_lea.vmem [#allocation7], %s280
        // Predicated region
        $region41: #{tpu_custom_call.1} parent=31 // pred_check
          %p282 = pneg %p102
        $region42: #{tpu_custom_call.1} parent=31 // pred_check_branch
          %284 = sbr.rel (%p282) target = $region44
        $region43: #{tpu_custom_call.1} parent=31 // pred_region
          %286 = dma.done %s279, 16
        $region44: #{tpu_custom_call.1} parent=31 // pred_fallthru
          _
        %s287 = sand.u32 %s37, 1
        %s288 = scalar_lea.sflag [#allocation3], %s287
        %s289 = sand.u32 %s37, 1
        %s290 = smul.addr %s289, 8
        %s291 = scalar_lea.vmem [#allocation2], %s290
        %p292 = pneg %p50
        %p293 = pneg %p47
        %s294 = sand.u32 %s29, 1
        %s295 = scalar_lea.sflag [#allocation6], %s294
        %s296 = sand.u32 %s63, 1
        %s297 = scalar_lea.vmem [#allocation5], %s296
        %p298 = pneg %p76
        %p299 = pneg %p73
        %s300 = sand.u32 %s29, 1
        %s301 = scalar_lea.sflag [#allocation6], %s300
        %s302 = sand.u32 %s89, 1
        %s303 = scalar_lea.vmem [#allocation7], %s302
        %p304 = pneg %p102
        %p305 = pneg %p99
        %p306 = pneg %p128
        %p307 = pneg %p125
        %s308 = sand.u32 %s115, 1
        %s309 = scalar_lea.sflag [#allocation4], %s308
        %s310 = sand.u32 %s115, 1
        %s311 = smul.addr %s310, 8
        %s312 = scalar_lea.vmem [#allocation8], %s311
        %p313 = pneg %p154
        %p314 = pneg %p151
        %s315 = sand.u32 %s29, 1
        %s316 = scalar_lea.sflag [#allocation10], %s315
        %s317 = sand.u32 %s141, 1
        %s318 = scalar_lea.vmem [#allocation9], %s317
        %p319 = pneg %p180
        %p320 = pneg %p177
        %s321 = sand.u32 %s29, 1
        %s322 = scalar_lea.sflag [#allocation10], %s321
        %s323 = sand.u32 %s167, 1
        %s324 = scalar_lea.vmem [#allocation11], %s323
        %v325 = vld [vmem:[%s263] sm:$0xff]
        %v326 = vrot.slane %v325, 4
        %v327 = vadd.f32 %v325, %v326
        %v328 = vrot.slane %v327, 2
        %v329 = vadd.f32 %v327, %v328
        %v330 = vrot.slane %v329, 1
        %v331 = vadd.f32 %v329, %v330
        %v332 = vmul.f32 %v331, 0.125
        %v333 = vsub.f32 %v325, %v332
        %v334 = vmul.f32 %v333, %v333
        %v335 = vrot.slane %v334, 4
        %v336 = vadd.f32 %v334, %v335
        %v337 = vrot.slane %v336, 2
        %v338 = vadd.f32 %v336, %v337
        %v339 = vrot.slane %v338, 1
        %v340 = vadd.f32 %v338, %v339
        %v341 = vmul.f32 %v340, 0.14285715
        %v342 = vmul.f32 %v341, 0.125
        %v343 = vadd.f32 %v342, 0.001
        %v344 = vrsqrt.pop %v343
        %v345 = vmul.f32 %v344, %v343
        %v346 = vmul.f32 %v345, %v344
        %v347 = vmul.f32 0.5, %v346
        %v348 = vsub.f32 1.5, %v347
        %v349 = vmul.f32 %v344, %v348
        %vm350 = vweird.f32 %v343
        %vm351 = vweird.f32 %v344
        %vm352 = vmor %vm350, %vm351
        %v353 = vsel %vm352, %v344, %v349
        %v354 = vld [vmem:[%s272] sm:$0x1]
        %v355 = vld [vmem:[%s281] sm:$0x1]
        %v356 = vmul.f32 %v354, %v353
        %v357 = vmul.f32 %v356, %v332
        %v358 = vsub.f32 %v355, %v357
        %v360 = vperm.slane %v356, 0
        %v362 = vmul.f32 %v325, %v360
        %v364 = vperm.slane %v358, 0
        %v366 = vadd.f32 %v362, %v364
        %367 = vst [vmem:[%s312] sm:$0xff] %v366
        %368 = vst [vmem:[%s318] sm:$0x1] %v332
        %369 = vst [vmem:[%s324] sm:$0x1] %v342
        %s370 = sand.u32 %s115, 1
        %s371 = scalar_lea.sflag [#allocation4], %s370
        %s372 = sand.u32 %s115, 1
        %s373 = smul.addr %s372, 8
        %s374 = scalar_lea.vmem [#allocation8], %s373
        %s375 = sand.u32 %s29, 1
        %s376 = scalar_lea.sflag [#allocation10], %s375
        %s377 = sand.u32 %s141, 1
        %s378 = scalar_lea.vmem [#allocation9], %s377
        %s379 = sand.u32 %s29, 1
        %s380 = scalar_lea.sflag [#allocation10], %s379
        %s381 = sand.u32 %s167, 1
        %s382 = scalar_lea.vmem [#allocation11], %s381
        // Predicated region
        $region45: #{tpu_custom_call.1} parent=31 // pred_check
          %p383 = pneg %p125
        $region46: #{tpu_custom_call.1} parent=31 // pred_check_branch
          %385 = sbr.rel (%p383) target = $region48
        $region47: #{tpu_custom_call.1} parent=31 // pred_region
          %387 = vsyncadd %s371, 0
          %s388 = smul.addr %s29, 8
          %s389 = scalar_lea.hbm %s3, %s388
          %s391 = sshll.u32 %s374, 4
          %s392 = int_to_ptr.vmem [resolvable:$true] %s391
          %s393 = sshll.u32 %s389, 4
          %s394 = int_to_ptr.hbm [resolvable:$true] %s393
          %396 = dma.vmem_to_hbm [thread:$0]  %s392, 128, %s394, %s371
        $region48: #{tpu_custom_call.1} parent=31 // pred_fallthru
          _
        // Predicated region
        $region49: #{tpu_custom_call.1} parent=31 // pred_check
          %p397 = pneg %p151
        $region50: #{tpu_custom_call.1} parent=31 // pred_check_branch
          %399 = sbr.rel (%p397) target = $region52
        $region51: #{tpu_custom_call.1} parent=31 // pred_region
          %401 = vsyncadd %s376, 0
          %s402 = scalar_lea.hbm %s4, %s29
          %s404 = sshll.u32 %s378, 4
          %s405 = int_to_ptr.vmem [resolvable:$true] %s404
          %s406 = sshll.u32 %s402, 4
          %s407 = int_to_ptr.hbm [resolvable:$true] %s406
          %409 = dma.vmem_to_hbm [thread:$0]  %s405, 16, %s407, %s376
        $region52: #{tpu_custom_call.1} parent=31 // pred_fallthru
          _
        // Predicated region
        $region53: #{tpu_custom_call.1} parent=31 // pred_check
          %p410 = pneg %p177
        $region54: #{tpu_custom_call.1} parent=31 // pred_check_branch
          %412 = sbr.rel (%p410) target = $region56
        $region55: #{tpu_custom_call.1} parent=31 // pred_region
          %414 = vsyncadd %s380, 0
          %s415 = scalar_lea.hbm %s5, %s29
          %s417 = sshll.u32 %s382, 4
          %s418 = int_to_ptr.vmem [resolvable:$true] %s417
          %s419 = sshll.u32 %s415, 4
          %s420 = int_to_ptr.hbm [resolvable:$true] %s419
          %422 = dma.vmem_to_hbm [thread:$0]  %s418, 16, %s420, %s380
        $region56: #{tpu_custom_call.1} parent=31 // pred_fallthru
          _
      $region32: #{tpu_custom_call.1} parent=5 // pred_fallthru
        _
      %p423 = scmp.le.s32.totalorder 2, %s24
      // Predicated region
      $region57: #{tpu_custom_call.1} parent=5 // pred_check
        %p424 = pneg %p423
      $region58: #{tpu_custom_call.1} parent=5 // pred_check_branch
        %426 = sbr.rel (%p424) target = $region60
      $region59: #{tpu_custom_call.1} parent=5 // pred_region
        %s427 = ssub.s32 %s24, 2
        // Predicated region
        $region61: #{tpu_custom_call.1} parent=59 // pred_check
          %p428 = pneg %p131
        $region62: #{tpu_custom_call.1} parent=59 // pred_check_branch
          %430 = sbr.rel (%p428) target = $region64
        $region63: #{tpu_custom_call.1} parent=59 // pred_region
          %s431 = sand.u32 %s116, 1
          %s432 = scalar_lea.sflag [#allocation4], %s431
          %s433 = sand.u32 %s116, 1
          %s434 = smul.addr %s433, 8
          %s435 = scalar_lea.vmem [#allocation8], %s434
          %437 = dma.done %s432, 128
        $region64: #{tpu_custom_call.1} parent=59 // pred_fallthru
          _
        // Predicated region
        $region65: #{tpu_custom_call.1} parent=59 // pred_check
          %p438 = pneg %p157
        $region66: #{tpu_custom_call.1} parent=59 // pred_check_branch
          %440 = sbr.rel (%p438) target = $region68
        $region67: #{tpu_custom_call.1} parent=59 // pred_region
          %s441 = sand.u32 %s30, 1
          %s442 = scalar_lea.sflag [#allocation10], %s441
          %s443 = sand.u32 %s142, 1
          %s444 = scalar_lea.vmem [#allocation9], %s443
          %446 = dma.done %s442, 16
        $region68: #{tpu_custom_call.1} parent=59 // pred_fallthru
          _
        // Predicated region
        $region69: #{tpu_custom_call.1} parent=59 // pred_check
          %p447 = pneg %p183
        $region70: #{tpu_custom_call.1} parent=59 // pred_check_branch
          %449 = sbr.rel (%p447) target = $region72
        $region71: #{tpu_custom_call.1} parent=59 // pred_region
          %s450 = sand.u32 %s30, 1
          %s451 = scalar_lea.sflag [#allocation10], %s450
          %s452 = sand.u32 %s168, 1
          %s453 = scalar_lea.vmem [#allocation11], %s452
          %455 = dma.done %s451, 16
        $region72: #{tpu_custom_call.1} parent=59 // pred_fallthru
          _
      $region60: #{tpu_custom_call.1} parent=5 // pred_fallthru
        _
    $region6: #{tpu_custom_call.1} parent=1 // loop_footer
      %s28 = sadd.s32 1, %s24
    $region7: #{tpu_custom_call.1} parent=1 // loop_footer_branch
      %23 = sbr.rel target = $region3
    $region8: #{tpu_custom_call.1} parent=1 // loop_exit
      _
    %456 = vsyncpa [#allocation3], 1
    %s457 = scalar_lea.sflag [#allocation3], 1
    %458 = vsyncpa %s457, 1
    %459 = vsyncpa [#allocation6], 1
    %s460 = scalar_lea.sflag [#allocation6], 1
    %461 = vsyncpa %s460, 1
    %462 = vsyncpa [#allocation4], 1
    %s463 = scalar_lea.sflag [#allocation4], 1
    %464 = vsyncpa %s463, 1
    %465 = vsyncpa [#allocation10], 1
    %s466 = scalar_lea.sflag [#allocation10], 1
    %467 = vsyncpa %s466, 1

</llo_original>
